<compile_context>
chip_gen: v7x
topology: tpu7x:2x2x1
jax: 0.10.0
libtpu: 0.0.40
codegen_flags: <defaults>
</compile_context>

<pallas_src>
import jax
import jax.numpy as jnp
from jax import lax
from jax.experimental import pallas as pl
from jax.experimental.pallas import tpu as pltpu

LN_EPS = 1e-5  # nn.LayerNorm default eps


def embeddings_kernel(tok_ids_ref, pos_col_ref, table_ref, gamma_ref, beta_ref,
                      out_ref):
    """One grid step == one tile of R = batch_block*S flattened (row, D) rows.

    tok_ids_ref : (R, 1)  int32  token ids (columns 0..n_inp-1 of `table`)
    pos_col_ref : (R, 1)  int32  n_inp + position id (columns n_inp..n_inp+S-1)
    table_ref   : (K, D)  f32    concat([emb, pos[:S]]), K = n_inp + S
    gamma_ref   : (1, D)  f32    LayerNorm weight
    beta_ref    : (1, D)  f32    LayerNorm bias
    out_ref     : (R, D)  f32
    """
    R = out_ref.shape[0]
    K = table_ref.shape[0]

    tok_ids = tok_ids_ref[...]                        # (R, 1) int32
    pos_col = pos_col_ref[...]                        # (R, 1) int32

    # One-hot with two ones per row: token column OR (offset) position column.
    col = lax.broadcasted_iota(jnp.int32, (R, K), 1)  # (R, K)
    onehot = ((col == tok_ids) | (col == pos_col)).astype(jnp.float32)

    # Single MXU matmul == emb[ids] + pos[pos_ids]   (exact: multipliers are 0/1)
    x = jnp.dot(onehot, table_ref[...],
                precision=lax.Precision.HIGHEST,
                preferred_element_type=jnp.float32)   # (R, D)

    # LayerNorm over the feature axis.
    mean = jnp.mean(x, axis=-1, keepdims=True)
    centered = x - mean
    var = jnp.mean(centered * centered, axis=-1, keepdims=True)
    y = centered * lax.rsqrt(var + LN_EPS)
    y = y * gamma_ref[...] + beta_ref[...]

    # Dropout with p = 0.0 is the identity -> nothing to do.
    out_ref[...] = y.astype(out_ref.dtype)


def _pick_batch_block(B, S, target_rows=512):
    """Largest batch tile whose row count is a legal, roomy VMEM block."""
    if B * S <= target_rows:
        return B                       # whole problem in one grid step
    for bb in range(B, 0, -1):
        if B % bb == 0 and bb * S <= target_rows and (bb * S) % 8 == 0:
            return bb
    return B


def transformer_embeddings(ids, emb, pos, gamma, beta, *, batch_block=None):
    B, S = ids.shape
    n_inp, D = emb.shape
    n_pos, _ = pos.shape
    assert S <= n_pos, "sequence length exceeds positional table"

    bb = batch_block if batch_block is not None else _pick_batch_block(B, S)
    assert B % bb == 0, "batch_block must divide batch"
    R = bb * S                          # rows per grid step
    grid = (B // bb,)
    K = n_inp + S                       # fused gather table rows

    # Fused gather table: token rows followed by the S positional rows we need.
    table = jnp.concatenate(
        [emb.astype(jnp.float32), pos[:S].astype(jnp.float32)], axis=0)  # (K, D)

    # Flatten to rows outside the kernel; ids as (B*S, 1) int32.
    ids_flat = ids.reshape(B * S, 1).astype(jnp.int32)
    # torch.ones_like(ids).cumsum(-1) - 1  ==  [0..S-1] per row; pre-offset by
    # n_inp so they directly index the concatenated table.
    pos_col = jnp.broadcast_to(
        (n_inp + jnp.arange(S, dtype=jnp.int32))[None, :], (B, S)
    ).reshape(B * S, 1)
    gamma2 = gamma.reshape(1, D).astype(jnp.float32)
    beta2 = beta.reshape(1, D).astype(jnp.float32)

    row_block = lambda t: (t, 0)
    const_block = lambda t: (0, 0)

    # Raise the scoped-VMEM limit only when the resident table needs it.
    # (A vocabulary too large for VMEM would instead keep the table in HBM and
    #  DMA-gather rows — out of scope at these sizes.)
    table_bytes = table.size * 4
    block_bytes = (R * D + 2 * R + 2 * D) * 4
    vmem_est = 2 * (table_bytes + 2 * block_bytes)      # default double-buffering
    cp_kwargs = dict(dimension_semantics=("parallel",))
    if vmem_est > (12 << 20):
        cp_kwargs["vmem_limit_bytes"] = int(min(vmem_est + (8 << 20), 96 << 20))

    out_flat = pl.pallas_call(
        embeddings_kernel,
        out_shape=jax.ShapeDtypeStruct((B * S, D), jnp.float32),
        grid_spec=pltpu.PrefetchScalarGridSpec(
            num_scalar_prefetch=0,
            grid=grid,
            in_specs=[
                pl.BlockSpec((R, 1), row_block),        # token ids
                pl.BlockSpec((R, 1), row_block),        # position columns
                pl.BlockSpec((K, D), const_block),      # fused emb||pos table
                pl.BlockSpec((1, D), const_block),      # LN gamma
                pl.BlockSpec((1, D), const_block),      # LN beta
            ],
            out_specs=pl.BlockSpec((R, D), row_block),
        ),
        compiler_params=pltpu.CompilerParams(**cp_kwargs),
    )(ids_flat, pos_col, table, gamma2, beta2)

    return out_flat.reshape(B, S, D)


def reference(ids, emb, pos, gamma, beta):
    """Pure-JAX reference matching the PyTorch forward."""
    S = ids.shape[1]
    x = emb[ids] + pos[jnp.arange(S)][None, :, :]
    mean = x.mean(-1, keepdims=True)
    var = ((x - mean) ** 2).mean(-1, keepdims=True)
    xn = (x - mean) / jnp.sqrt(var + LN_EPS)
    return xn * gamma[None, None, :] + beta[None, None, :]


if __name__ == "__main__":
    # Small shapes consistent with the module: vocab=32, max positions=8,
    # embed_dim=128 (lane-dense), batch=4, seq=8.
    n_inp, n_pos, D = 32, 8, 128
    B, S = 4, 8

    key = jax.random.PRNGKey(0)
    k_ids, k_emb, k_pos, k_g, k_b = jax.random.split(key, 5)

    ids = jax.random.randint(k_ids, (B, S), 0, n_inp, dtype=jnp.int32)
    # nn.Embedding default init: N(0, 1)
    emb = jax.random.normal(k_emb, (n_inp, D), dtype=jnp.float32)
    pos = jax.random.normal(k_pos, (n_pos, D), dtype=jnp.float32)
    # nn.LayerNorm default init is gamma=1, beta=0; perturb deterministically
    # so the affine part of the kernel is actually exercised.
    gamma = jnp.ones((D,), jnp.float32) + 0.1 * jax.random.normal(k_g, (D,), jnp.float32)
    beta = 0.1 * jax.random.normal(k_b, (D,), jnp.float32)

    # batch_block=2 -> grid of 2 steps, 16 rows per step (exercises the tiling).
    out = transformer_embeddings(ids, emb, pos, gamma, beta, batch_block=2)
    out = jax.block_until_ready(out)

    ref = reference(ids, emb, pos, gamma, beta)
    assert out.shape == (B, S, D), out.shape
    max_err = float(jnp.max(jnp.abs(out - ref)))
    assert jnp.allclose(out, ref, atol=1e-4, rtol=1e-4), max_err

    # TODO(synk): dropout_p > 0 would need pltpu.prng_seed/prng_random_bits; the
    # module defaults to p=0.0 (identity), which is what is implemented.
    print("KERNEL_OK")
</pallas_src>

<mosaic_0001>
module attributes {stable_mosaic.version = 11 : i64} {
  func.func @embeddings_kernel(%arg0: i32, %arg1: memref<16x1xi32, #tpu.memory_space<vmem>>, %arg2: memref<16x1xi32, #tpu.memory_space<vmem>>, %arg3: memref<40x128xf32, #tpu.memory_space<vmem>>, %arg4: memref<1x128xf32, #tpu.memory_space<vmem>>, %arg5: memref<1x128xf32, #tpu.memory_space<vmem>>, %arg6: memref<16x128xf32, #tpu.memory_space<vmem>>) attributes {dimension_semantics = [#tpu.dimension_semantics<parallel>], iteration_bounds = array<i64: 2>, scalar_prefetch = 0 : i64, scratch_operands = 0 : i64, tpu.core_type = #tpu.core_type<tc>, window_params = [{transform_indices = @transform_0, window_bounds = array<i64: 16, 1>}, {transform_indices = @transform_1, window_bounds = array<i64: 16, 1>}, {pipeline_mode = #tpu.pipeline_mode<synchronous>, transform_indices = @transform_2, window_bounds = array<i64: 40, 128>}, {pipeline_mode = #tpu.pipeline_mode<synchronous>, transform_indices = @transform_3, window_bounds = array<i64: 1, 128>}, {pipeline_mode = #tpu.pipeline_mode<synchronous>, transform_indices = @transform_4, window_bounds = array<i64: 1, 128>}, {transform_indices = @transform_5, window_bounds = array<i64: 16, 128>}]} {
    %c0 = arith.constant 0 : index
    %c0_0 = arith.constant 0 : index
    %0 = vector.load %arg1[%c0, %c0_0] : memref<16x1xi32, #tpu.memory_space<vmem>>, vector<16x1xi32>
    %c0_1 = arith.constant 0 : index
    %c0_2 = arith.constant 0 : index
    %1 = vector.load %arg2[%c0_1, %c0_2] : memref<16x1xi32, #tpu.memory_space<vmem>>, vector<16x1xi32>
    %2 = tpu.iota {dimensions = array<i32: 1>} : vector<16x40xi32>
    %3 = vector.broadcast %0 : vector<16x1xi32> to vector<16x40xi32>
    %4 = arith.cmpi eq, %2, %3 : vector<16x40xi32>
    %5 = vector.broadcast %1 : vector<16x1xi32> to vector<16x40xi32>
    %6 = arith.cmpi eq, %2, %5 : vector<16x40xi32>
    %7 = arith.ori %4, %6 : vector<16x40xi1>
    %8 = arith.extui %7 : vector<16x40xi1> to vector<16x40xi32>
    %9 = arith.sitofp %8 : vector<16x40xi32> to vector<16x40xf32>
    %c0_3 = arith.constant 0 : index
    %c0_4 = arith.constant 0 : index
    %10 = vector.load %arg3[%c0_3, %c0_4] : memref<40x128xf32, #tpu.memory_space<vmem>>, vector<40x128xf32>
    %cst = arith.constant dense<0.000000e+00> : vector<16x128xf32>
    %11 = tpu.matmul %9, %10, %cst {dimension_numbers = #tpu.dot_dimension_numbers<[1], [0], [0], [1], [0, 0, 1, 1], [], []>, precision = #tpu.contract_precision<fp32>} : vector<16x40xf32>, vector<40x128xf32>, vector<16x128xf32> -> vector<16x128xf32>
    %cst_5 = arith.constant dense<0.000000e+00> : vector<16xf32>
    %12 = vector.multi_reduction <add>, %11, %cst_5 [1] : vector<16x128xf32> to vector<16xf32>
    %13 = vector.shape_cast %12 : vector<16xf32> to vector<16x1xf32>
    %cst_6 = arith.constant 1.280000e+02 : f32
    %14 = vector.broadcast %cst_6 : f32 to vector<16x1xf32>
    %15 = arith.divf %13, %14 : vector<16x1xf32>
    %16 = vector.broadcast %15 : vector<16x1xf32> to vector<16x128xf32>
    %17 = arith.subf %11, %16 : vector<16x128xf32>
    %18 = arith.mulf %17, %17 : vector<16x128xf32>
    %cst_7 = arith.constant dense<0.000000e+00> : vector<16xf32>
    %19 = vector.multi_reduction <add>, %18, %cst_7 [1] : vector<16x128xf32> to vector<16xf32>
    %20 = vector.shape_cast %19 : vector<16xf32> to vector<16x1xf32>
    %cst_8 = arith.constant 1.280000e+02 : f32
    %21 = vector.broadcast %cst_8 : f32 to vector<16x1xf32>
    %22 = arith.divf %20, %21 : vector<16x1xf32>
    %cst_9 = arith.constant 9.99999974E-6 : f32
    %23 = vector.broadcast %cst_9 : f32 to vector<16x1xf32>
    %24 = arith.addf %22, %23 : vector<16x1xf32>
    %25 = math.rsqrt %24 : vector<16x1xf32>
    %26 = vector.broadcast %25 : vector<16x1xf32> to vector<16x128xf32>
    %27 = arith.mulf %17, %26 : vector<16x128xf32>
    %c0_10 = arith.constant 0 : index
    %c0_11 = arith.constant 0 : index
    %28 = vector.load %arg4[%c0_10, %c0_11] : memref<1x128xf32, #tpu.memory_space<vmem>>, vector<1x128xf32>
    %29 = vector.broadcast %28 : vector<1x128xf32> to vector<16x128xf32>
    %30 = arith.mulf %27, %29 : vector<16x128xf32>
    %c0_12 = arith.constant 0 : index
    %c0_13 = arith.constant 0 : index
    %31 = vector.load %arg5[%c0_12, %c0_13] : memref<1x128xf32, #tpu.memory_space<vmem>>, vector<1x128xf32>
    %32 = vector.broadcast %31 : vector<1x128xf32> to vector<16x128xf32>
    %33 = arith.addf %30, %32 : vector<16x128xf32>
    %c0_14 = arith.constant 0 : index
    %c0_15 = arith.constant 0 : index
    %34 = vector.load %arg6[%c0_14, %c0_15] : memref<16x128xf32, #tpu.memory_space<vmem>>, vector<16x128xf32>
    tpu.vector_store %arg6[%c0_14, %c0_15], %33 {strides = array<i32>} : memref<16x128xf32, #tpu.memory_space<vmem>>, vector<16x128xf32>,
    return
  }
  func.func @transform_0(%arg0: i32) -> (i32, i32) {
    %c0_i32 = arith.constant 0 : i32
    %c0_i32_0 = arith.constant 0 : i32
    return %arg0, %c0_i32 : i32, i32
  }
  func.func @transform_1(%arg0: i32) -> (i32, i32) {
    %c0_i32 = arith.constant 0 : i32
    %c0_i32_0 = arith.constant 0 : i32
    return %arg0, %c0_i32 : i32, i32
  }
  func.func @transform_2(%arg0: i32) -> (i32, i32) {
    %c0_i32 = arith.constant 0 : i32
    %c0_i32_0 = arith.constant 0 : i32
    %c0_i32_1 = arith.constant 0 : i32
    return %c0_i32, %c0_i32_0 : i32, i32
  }
  func.func @transform_3(%arg0: i32) -> (i32, i32) {
    %c0_i32 = arith.constant 0 : i32
    %c0_i32_0 = arith.constant 0 : i32
    %c0_i32_1 = arith.constant 0 : i32
    return %c0_i32, %c0_i32_0 : i32, i32
  }
  func.func @transform_4(%arg0: i32) -> (i32, i32) {
    %c0_i32 = arith.constant 0 : i32
    %c0_i32_0 = arith.constant 0 : i32
    %c0_i32_1 = arith.constant 0 : i32
    return %c0_i32, %c0_i32_0 : i32, i32
  }
  func.func @transform_5(%arg0: i32) -> (i32, i32) {
    %c0_i32 = arith.constant 0 : i32
    %c0_i32_0 = arith.constant 0 : i32
    return %arg0, %c0_i32 : i32, i32
  }
}

</mosaic_0001>

<llo_original>
// kernel: tpu_custom_call.1
$region0: #{tpu_custom_call.1}
  #allocation0 [shape = 'u32[]', space=smem, size = 0x4, offset = 0x4, fixed_abs, tag = 'smem constant byte address 0x4 - core index']
  #allocation1 [shape = 'u32[144,128]{1,0:T(1,128)}', space=vmem, size = 0x12000, scoped, tag = 'internal scratch']
  %s0 = inlined_call_operand.vmem [shape: s32[32,1], index: 0, kind: input, shape index: {}]
  %s1 = inlined_call_operand.vmem [shape: s32[32,1], index: 1, kind: input, shape index: {}]
  %s2 = inlined_call_operand.vmem [shape: f32[40,128], index: 2, kind: input, shape index: {}]
  %s3 = inlined_call_operand.vmem [shape: f32[1,128], index: 3, kind: input, shape index: {}]
  %s4 = inlined_call_operand.vmem [shape: f32[1,128], index: 4, kind: input, shape index: {}]
  %s5 = inlined_call_operand.hbm [shape: f32[32,128], index: 5, kind: output, shape index: {}]
  %s6 = sld [smem:[#allocation0]]
  $region53: #{tpu_custom_call.1} parent=0
    _
  %s8 = ssub.s32 1, %s6
  %s9 = scalar_select 0, %s8, %s6
  $region1: #{tpu_custom_call.1} parent=0
    #allocation2 [shape = 'u8[16384]{0}', space=vmem, size = 0x4000, scoped, tag = 'output window, operand 0']
    #allocation3 [shape = 's32[2]{0}', space=sflag, size = 0x8, scoped, tag = 'scoped memory for tpu_custom_call.1']
    %10 = vsyncpa [#allocation3], 0
    %s11 = scalar_lea.sflag [#allocation3], 1
    %12 = vsyncpa %s11, 0
    loop: start=0, step=1, limit=4
    $region2: #{tpu_custom_call.1} parent=1 // loop_pre_header
      _
    $region3: #{tpu_custom_call.1} parent=1 // loop_header
      %s14 = sphi 0, %s18
      %p15 = scmp.ge.s32.totalorder %s14, 4
      %s24 = sphi 0, %s26
      %s27 = sphi 0, %s24
      %s28 = sphi 0, %s27
      %s44 = sphi 0, %s28
      %s50 = sphi 0, %s52
      %s53 = sphi 0, %s50
      %s54 = sphi 0, %s53
      %s70 = sphi 0, %s54
      %s74 = sphi 0, %s74
      %s76 = sphi 0, %s74
      %s77 = sphi 0, %s76
      %s91 = sphi 0, %s77
      %s95 = sphi 0, %s95
      %s97 = sphi 0, %s95
      %s98 = sphi 0, %s97
      %s112 = sphi 0, %s98
      %s116 = sphi 0, %s116
      %s118 = sphi 0, %s116
      %s119 = sphi 0, %s118
      %s133 = sphi 0, %s119
      %s139 = sphi 0, %s141
      %s142 = sphi 0, %s139
      %s143 = sphi 0, %s142
      %s159 = sphi 0, %s143
    $region4: #{tpu_custom_call.1} parent=1 // loop_header_branch
      %17 = sbr.rel (%p15) target = $region8
    $region5: #{tpu_custom_call.1} parent=1 // loop_body
      %s19 = ssub.s32 %s14, 1
      %s20 = ssub.s32 %s14, 2
      %s21 = sadd.s32 %s14, 1
      %s22 = ssub.s32 %s14, %s21
      %p23 = scmp.eq.s32.totalorder %s22, 0
      %s25 = sadd.s32 %s24, 1
      %s26 = scalar_select %p23, %s24, %s25
      %p29 = pneg %p23
      %p30 = scmp.eq.s32.totalorder %s14, 1
      %p31 = por %p29, %p30
      %p32 = scmp.ne.s32.totalorder %s24, %s27
      %p33 = scmp.eq.s32.totalorder %s14, 0
      %p34 = por %p32, %p33
      %p35 = scmp.ne.s32.totalorder %s24, %s27
      %p36 = scmp.eq.s32.totalorder %s19, 1
      %p37 = por %p35, %p36
      %p38 = scmp.ne.s32.totalorder %s27, %s28
      %p39 = scmp.eq.s32.totalorder %s19, 0
      %p40 = por %p38, %p39
      %p41 = scmp.ne.s32.totalorder %s27, %s28
      %p42 = scmp.eq.s32.totalorder %s20, 1
      %p43 = por %p41, %p42
      %p45 = scmp.ne.s32.totalorder %s28, %s44
      %p46 = scmp.eq.s32.totalorder %s20, 0
      %p47 = por %p45, %p46
      %s48 = ssub.s32 %s14, %s21
      %p49 = scmp.eq.s32.totalorder %s48, 0
      %s51 = sadd.s32 %s50, 1
      %s52 = scalar_select %p49, %s50, %s51
      %p55 = pneg %p49
      %p56 = scmp.eq.s32.totalorder %s14, 1
      %p57 = por %p55, %p56
      %p58 = scmp.ne.s32.totalorder %s50, %s53
      %p59 = scmp.eq.s32.totalorder %s14, 0
      %p60 = por %p58, %p59
      %p61 = scmp.ne.s32.totalorder %s50, %s53
      %p62 = scmp.eq.s32.totalorder %s19, 1
      %p63 = por %p61, %p62
      %p64 = scmp.ne.s32.totalorder %s53, %s54
      %p65 = scmp.eq.s32.totalorder %s19, 0
      %p66 = por %p64, %p65
      %p67 = scmp.ne.s32.totalorder %s53, %s54
      %p68 = scmp.eq.s32.totalorder %s20, 1
      %p69 = por %p67, %p68
      %p71 = scmp.ne.s32.totalorder %s54, %s70
      %p72 = scmp.eq.s32.totalorder %s20, 0
      %p73 = por %p71, %p72
      %s75 = sadd.s32 %s74, 1
      %p78 = scmp.eq.s32.totalorder %s14, 1
      %p79 = scmp.ne.s32.totalorder %s74, %s76
      %p80 = scmp.eq.s32.totalorder %s14, 0
      %p81 = por %p79, %p80
      %p82 = scmp.ne.s32.totalorder %s74, %s76
      %p83 = scmp.eq.s32.totalorder %s19, 1
      %p84 = por %p82, %p83
      %p85 = scmp.ne.s32.totalorder %s76, %s77
      %p86 = scmp.eq.s32.totalorder %s19, 0
      %p87 = por %p85, %p86
      %p88 = scmp.ne.s32.totalorder %s76, %s77
      %p89 = scmp.eq.s32.totalorder %s20, 1
      %p90 = por %p88, %p89
      %p92 = scmp.ne.s32.totalorder %s77, %s91
      %p93 = scmp.eq.s32.totalorder %s20, 0
      %p94 = por %p92, %p93
      %s96 = sadd.s32 %s95, 1
      %p99 = scmp.eq.s32.totalorder %s14, 1
      %p100 = scmp.ne.s32.totalorder %s95, %s97
      %p101 = scmp.eq.s32.totalorder %s14, 0
      %p102 = por %p100, %p101
      %p103 = scmp.ne.s32.totalorder %s95, %s97
      %p104 = scmp.eq.s32.totalorder %s19, 1
      %p105 = por %p103, %p104
      %p106 = scmp.ne.s32.totalorder %s97, %s98
      %p107 = scmp.eq.s32.totalorder %s19, 0
      %p108 = por %p106, %p107
      %p109 = scmp.ne.s32.totalorder %s97, %s98
      %p110 = scmp.eq.s32.totalorder %s20, 1
      %p111 = por %p109, %p110
      %p113 = scmp.ne.s32.totalorder %s98, %s112
      %p114 = scmp.eq.s32.totalorder %s20, 0
      %p115 = por %p113, %p114
      %s117 = sadd.s32 %s116, 1
      %p120 = scmp.eq.s32.totalorder %s14, 1
      %p121 = scmp.ne.s32.totalorder %s116, %s118
      %p122 = scmp.eq.s32.totalorder %s14, 0
      %p123 = por %p121, %p122
      %p124 = scmp.ne.s32.totalorder %s116, %s118
      %p125 = scmp.eq.s32.totalorder %s19, 1
      %p126 = por %p124, %p125
      %p127 = scmp.ne.s32.totalorder %s118, %s119
      %p128 = scmp.eq.s32.totalorder %s19, 0
      %p129 = por %p127, %p128
      %p130 = scmp.ne.s32.totalorder %s118, %s119
      %p131 = scmp.eq.s32.totalorder %s20, 1
      %p132 = por %p130, %p131
      %p134 = scmp.ne.s32.totalorder %s119, %s133
      %p135 = scmp.eq.s32.totalorder %s20, 0
      %p136 = por %p134, %p135
      %s137 = ssub.s32 %s14, %s21
      %p138 = scmp.eq.s32.totalorder %s137, 0
      %s140 = sadd.s32 %s139, 1
      %s141 = scalar_select %p138, %s139, %s140
      %p144 = pneg %p138
      %p145 = scmp.eq.s32.totalorder %s14, 1
      %p146 = por %p144, %p145
      %p147 = scmp.ne.s32.totalorder %s139, %s142
      %p148 = scmp.eq.s32.totalorder %s14, 0
      %p149 = por %p147, %p148
      %p150 = scmp.ne.s32.totalorder %s139, %s142
      %p151 = scmp.eq.s32.totalorder %s19, 1
      %p152 = por %p150, %p151
      %p153 = scmp.ne.s32.totalorder %s142, %s143
      %p154 = scmp.eq.s32.totalorder %s19, 0
      %p155 = por %p153, %p154
      %p156 = scmp.ne.s32.totalorder %s142, %s143
      %p157 = scmp.eq.s32.totalorder %s20, 1
      %p158 = por %p156, %p157
      %p160 = scmp.ne.s32.totalorder %s143, %s159
      %p161 = scmp.eq.s32.totalorder %s20, 0
      %p162 = por %p160, %p161
      %p163 = scmp.le.s32.totalorder 1, %s14
      %p164 = scmp.lt.s32.totalorder %s14, 3
      %p165 = pnand %p163, %p164
      %p166 = pneg %p165
      // Predicated region
      $region9: #{tpu_custom_call.1} parent=5 // pred_check
        _
      $region10: #{tpu_custom_call.1} parent=5 // pred_check_branch
        %168 = sbr.rel (%p165) target = $region12
      $region11: #{tpu_custom_call.1} parent=5 // pred_region
        %s169 = ssub.s32 %s14, 1
        // Predicated region
        $region13: #{tpu_custom_call.1} parent=11 // pred_check
          %p170 = pneg %p87
        $region14: #{tpu_custom_call.1} parent=11 // pred_check_branch
          %172 = sbr.rel (%p170) target = $region16
        $region15: #{tpu_custom_call.1} parent=11 // pred_region
          _
        $region16: #{tpu_custom_call.1} parent=11 // pred_fallthru
          _
        // Predicated region
        $region17: #{tpu_custom_call.1} parent=11 // pred_check
          %p173 = pneg %p108
        $region18: #{tpu_custom_call.1} parent=11 // pred_check_branch
          %175 = sbr.rel (%p173) target = $region20
        $region19: #{tpu_custom_call.1} parent=11 // pred_region
          _
        $region20: #{tpu_custom_call.1} parent=11 // pred_fallthru
          _
        // Predicated region
        $region21: #{tpu_custom_call.1} parent=11 // pred_check
          %p176 = pneg %p129
        $region22: #{tpu_custom_call.1} parent=11 // pred_check_branch
          %178 = sbr.rel (%p176) target = $region24
        $region23: #{tpu_custom_call.1} parent=11 // pred_region
          _
        $region24: #{tpu_custom_call.1} parent=11 // pred_fallthru
          _
      $region12: #{tpu_custom_call.1} parent=5 // pred_fallthru
        _
      %p179 = scmp.lt.s32.totalorder %s14, 2
      // Predicated region
      $region25: #{tpu_custom_call.1} parent=5 // pred_check
        %p180 = pneg %p179
      $region26: #{tpu_custom_call.1} parent=5 // pred_check_branch
        %182 = sbr.rel (%p180) target = $region28
      $region27: #{tpu_custom_call.1} parent=5 // pred_region
        // Predicated region
        $region29: #{tpu_custom_call.1} parent=27 // pred_check
          %p183 = pneg %p34
        $region30: #{tpu_custom_call.1} parent=27 // pred_check_branch
          %185 = sbr.rel (%p183) target = $region32
        $region31: #{tpu_custom_call.1} parent=27 // pred_region
          %s186 = smul.u32 2, %s14
          %p187 = scmp.lt.s32.totalorder %s186, 3
          %s188 = scalar_select %p187, %s186, 3
          %s189 = smul.addr %s188, 8
          %s190 = scalar_lea.vmem %s0, %s189
          %s191 = smul.u32 2, %s14
        $region32: #{tpu_custom_call.1} parent=27 // pred_fallthru
          _
        // Predicated region
        $region33: #{tpu_custom_call.1} parent=27 // pred_check
          %p192 = pneg %p60
        $region34: #{tpu_custom_call.1} parent=27 // pred_check_branch
          %194 = sbr.rel (%p192) target = $region36
        $region35: #{tpu_custom_call.1} parent=27 // pred_region
          %s195 = smul.u32 2, %s14
          %p196 = scmp.lt.s32.totalorder %s195, 3
          %s197 = scalar_select %p196, %s195, 3
          %s198 = smul.addr %s197, 8
          %s199 = scalar_lea.vmem %s1, %s198
          %s200 = smul.u32 2, %s14
        $region36: #{tpu_custom_call.1} parent=27 // pred_fallthru
          _
      $region28: #{tpu_custom_call.1} parent=5 // pred_fallthru
        _
      %p201 = scmp.le.s32.totalorder 1, %s14
      %p202 = scmp.lt.s32.totalorder %s14, 3
      %p203 = pnand %p201, %p202
      %p204 = pneg %p203
      // Predicated region
      $region37: #{tpu_custom_call.1} parent=5 // pred_check
        _
      $region38: #{tpu_custom_call.1} parent=5 // pred_check_branch
        %206 = sbr.rel (%p203) target = $region40
      $region39: #{tpu_custom_call.1} parent=5 // pred_region
        %s207 = ssub.s32 %s14, 1
        %s208 = smul.u32 2, %s19
        %p209 = scmp.lt.s32.totalorder %s208, 3
        %s210 = scalar_select %p209, %s208, 3
        %s211 = smul.addr %s210, 8
        %s212 = scalar_lea.vmem %s0, %s211
        %p213 = pneg %p40
        %p214 = pneg %p37
        %s215 = smul.u32 2, %s19
        %p216 = scmp.lt.s32.totalorder %s215, 3
        %s217 = scalar_select %p216, %s215, 3
        %s218 = smul.addr %s217, 8
        %s219 = scalar_lea.vmem %s1, %s218
        %p220 = pneg %p66
        %p221 = pneg %p63
        %p222 = pneg %p87
        %p223 = pneg %p84
        %p224 = pneg %p108
        %p225 = pneg %p105
        %p226 = pneg %p129
        %p227 = pneg %p126
        %p228 = pneg %p155
        %p229 = pneg %p152
        %s230 = sand.u32 %s142, 1
        %s231 = scalar_lea.sflag [#allocation3], %s230
        %s232 = sand.u32 %s142, 1
        %s233 = smul.addr %s232, 16
        %s234 = scalar_lea.vmem [#allocation2], %s233
        %s235 = smul.u32 2, %s19
        %p236 = scmp.lt.s32.totalorder %s235, 3
        %s237 = scalar_select %p236, %s235, 3
        %s238 = smul.addr %s237, 8
        %s239 = scalar_lea.vmem %s0, %s238
        %s240 = smul.u32 2, %s19
        %s241 = smul.u32 2, %s19
        %p242 = scmp.lt.s32.totalorder %s241, 3
        %s243 = scalar_select %p242, %s241, 3
        %s244 = smul.addr %s243, 8
        %s245 = scalar_lea.vmem %s1, %s244
        %s246 = smul.u32 2, %s19
        %s247 = smul.u32 2, %s19
        %v248 = vld [vmem:[%s239] sm:$0xff]
        %v249 = vld [vmem:[%s239 + $0x8] sm:$0xff]
        %v250 = vld [vmem:[%s245] sm:$0xff]
        %v251 = vld [vmem:[%s245 + $0x8] sm:$0xff]
        %v252 = vlaneseq
        %v253 = vand.u32 %v252, 127
        %254 = vset.pattern.permute.xlu0 0
        %255 = vperm.xlu0 %254, %v248
        %v256 = vpop.permute.xlu0 %255
        %257 = vset.pattern.permute.xlu0 0
        %258 = vperm.xlu0 %257, %v249
        %v259 = vpop.permute.xlu0 %258
        %vm260 = vcmp.eq.s32.totalorder %v253, %v256
        %vm261 = vcmp.eq.s32.totalorder %v253, %v259
        %262 = vset.pattern.permute.xlu0 0
        %263 = vperm.xlu0 %262, %v250
        %v264 = vpop.permute.xlu0 %263
        %265 = vset.pattern.permute.xlu0 0
        %266 = vperm.xlu0 %265, %v251
        %v267 = vpop.permute.xlu0 %266
        %vm268 = vcmp.eq.s32.totalorder %v253, %v264
        %vm269 = vcmp.eq.s32.totalorder %v253, %v267
        %vm270 = vmor %vm260, %vm268
        %vm271 = vmor %vm261, %vm269
        %v272 = vsel %vm270, 1, 0
        %v273 = vsel %vm271, 1, 0
        %v274 = vcvt.s32.f32 %v272
        %v275 = vcvt.s32.f32 %v273
        %v276 = vld [vmem:[%s2] sm:$0xff]
        %v277 = vld [vmem:[%s2 + $0x8] sm:$0xff]
        %v278 = vld [vmem:[%s2 + $0x10] sm:$0xff]
        %v279 = vld [vmem:[%s2 + $0x18] sm:$0xff]
        %v280 = vld [vmem:[%s2 + $0x20] sm:$0xff]
        %vm281 = vcmask 326656
        %v283 = vsel %vm281, %v274, 0
        %v286 = vsel %vm281, %v275, 0
        %288 = vmatprep.subr.mxu0 0.0
        %v289 = vand.u32 %v276, 4294901760
        %290 = vmatpush1.msra.mxu0 %v289
        %291 = vmatprep.subr.mxu0 0.0
        %v292 = vand.u32 %v277, 4294901760
        %293 = vmatpush1.msra.mxu0 %v292
        %294 = vmatprep.subr.mxu0 0.0
        %v295 = vand.u32 %v278, 4294901760
        %296 = vmatpush1.msra.mxu0 %v295
        %297 = vmatprep.subr.mxu0 0.0
        %v298 = vand.u32 %v279, 4294901760
        %299 = vmatpush1.msra.mxu0 %v298
        %300 = vmatprep.subr.mxu0 0.0
        %v301 = vand.u32 %v280, 4294901760
        %302 = vmatpush1.msra.mxu0 %v301
        %303 = vmatprep.subr.mxu0 0.0
        %304 = vmatpush1.msra.mxu0 0.0
        %305 = vmatprep.subr.mxu0 0.0
        %306 = vmatpush1.msra.mxu0 0.0
        %307 = vmatprep.subr.mxu0 0.0
        %308 = vmatpush1.msra.mxu0 0.0
        %309 = vmatprep.subr.mxu0 0.0
        %310 = vmatpush1.msra.mxu0 0.0
        %311 = vmatprep.subr.mxu0 0.0
        %312 = vmatpush1.msra.mxu0 0.0
        %313 = vmatprep.subr.mxu0 0.0
        %314 = vmatpush1.msra.mxu0 0.0
        %315 = vmatprep.subr.mxu0 0.0
        %316 = vmatpush1.msra.mxu0 0.0
        %317 = vmatprep.subr.mxu0 0.0
        %318 = vmatpush1.msra.mxu0 0.0
        %319 = vmatprep.subr.mxu0 0.0
        %320 = vmatpush1.msra.mxu0 0.0
        %321 = vmatprep.subr.mxu0 0.0
        %322 = vmatpush1.msra.mxu0 0.0
        %323 = vmatprep.subr.mxu0 0.0
        %324 = vmatpush1.msra.mxu0 0.0
        %325 = vmatprep.subr.mxu0 0.0
        %326 = vmatpush1.msra.mxu0 0.0
        %327 = vmatprep.subr.mxu0 0.0
        %328 = vmatpush1.msra.mxu0 0.0
        %329 = vmatprep.subr.mxu0 0.0
        %330 = vmatpush1.msra.mxu0 0.0
        %331 = vmatprep.subr.mxu0 0.0
        %332 = vmatpush1.msra.mxu0 0.0
        %333 = vmatprep.subr.mxu0 0.0
        %334 = vmatpush1.msra.mxu0 0.0
        %335 = vmatprep.subr.mxu0 0.0
        %336 = vmatpush1.msra.mxu0 0.0
        %337 = vmatprep.subr.mxu0 0.0
        %338 = vmatpush1.msra.mxu0 0.0
        %339 = vmatprep.subr.mxu0 0.0
        %340 = vmatpush1.msra.mxu0 0.0
        %341 = vmatprep.subr.mxu0 0.0
        %342 = vmatpush1.msra.mxu0 0.0
        %343 = vmatprep.subr.mxu0 0.0
        %344 = vmatpush1.msra.mxu0 0.0
        %345 = vmatprep.subr.mxu0 0.0
        %346 = vmatpush1.msra.mxu0 0.0
        %347 = vmatprep.subr.mxu0 0.0
        %348 = vmatpush1.msra.mxu0 0.0
        %349 = vmatprep.subr.mxu0 0.0
        %350 = vmatpush1.msra.mxu0 0.0
        %351 = vmatprep.subr.mxu0 0.0
        %352 = vmatpush1.msra.mxu0 0.0
        %353 = vmatprep.subr.mxu0 0.0
        %354 = vmatpush1.msra.mxu0 0.0
        %355 = vmatprep.subr.mxu0 0.0
        %356 = vmatpush1.msra.mxu0 0.0
        %357 = vmatprep.mubr.f32.mxu0 0.0
        %v358 = vand.u32 %v283, 4294901760
        %v359 = vsub.f32 %v283, %v358
        %v360 = vand.u32 %v359, 4294901760
        %v361 = vsub.f32 %v359, %v360
        %v362 = vand.u32 %v361, 4294901760
        %363 = vmatmul.mubr.f32.gmra.mrb[0].mxu0 %v362
        %v364 = vpop.f32.mrb[0].mxu0
        %v365 = vadd.f32 0.0, %v364
        %v366 = vpop.f32.mrb[0].mxu0
        %367 = vmatprep.mubr.f32.mxu0 0.0
        %v368 = vand.u32 %v286, 4294901760
        %v369 = vsub.f32 %v286, %v368
        %v370 = vand.u32 %v369, 4294901760
        %v371 = vsub.f32 %v369, %v370
        %v372 = vand.u32 %v371, 4294901760
        %373 = vmatmul.mubr.f32.gmra.mrb[0].mxu0 %v372
        %v374 = vpop.f32.mrb[0].mxu0
        %v375 = vadd.f32 0.0, %v374
        %v376 = vpop.f32.mrb[0].mxu0
        %377 = vdwg.mxu0
        %378 = vmatprep.subr.mxu0 0.0
        %v379 = vand.u32 %v276, 4294901760
        %v380 = vsub.f32 %v276, %v379
        %v381 = vand.u32 %v380, 4294901760
        %v382 = vsub.f32 %v380, %v381
        %v383 = vand.u32 %v382, 4294901760
        %384 = vmatpush1.msra.mxu0 %v383
        %385 = vmatprep.subr.mxu0 0.0
        %v386 = vand.u32 %v277, 4294901760
        %v387 = vsub.f32 %v277, %v386
        %v388 = vand.u32 %v387, 4294901760
        %v389 = vsub.f32 %v387, %v388
        %v390 = vand.u32 %v389, 4294901760
        %391 = vmatpush1.msra.mxu0 %v390
        %392 = vmatprep.subr.mxu0 0.0
        %v393 = vand.u32 %v278, 4294901760
        %v394 = vsub.f32 %v278, %v393
        %v395 = vand.u32 %v394, 4294901760
        %v396 = vsub.f32 %v394, %v395
        %v397 = vand.u32 %v396, 4294901760
        %398 = vmatpush1.msra.mxu0 %v397
        %399 = vmatprep.subr.mxu0 0.0
        %v400 = vand.u32 %v279, 4294901760
        %v401 = vsub.f32 %v279, %v400
        %v402 = vand.u32 %v401, 4294901760
        %v403 = vsub.f32 %v401, %v402
        %v404 = vand.u32 %v403, 4294901760
        %405 = vmatpush1.msra.mxu0 %v404
        %406 = vmatprep.subr.mxu0 0.0
        %v407 = vand.u32 %v280, 4294901760
        %v408 = vsub.f32 %v280, %v407
        %v409 = vand.u32 %v408, 4294901760
        %v410 = vsub.f32 %v408, %v409
        %v411 = vand.u32 %v410, 4294901760
        %412 = vmatpush1.msra.mxu0 %v411
        %413 = vmatprep.subr.mxu0 0.0
        %414 = vmatpush1.msra.mxu0 0.0
        %415 = vmatprep.subr.mxu0 0.0
        %416 = vmatpush1.msra.mxu0 0.0
        %417 = vmatprep.subr.mxu0 0.0
        %418 = vmatpush1.msra.mxu0 0.0
        %419 = vmatprep.subr.mxu0 0.0
        %420 = vmatpush1.msra.mxu0 0.0
        %421 = vmatprep.subr.mxu0 0.0
        %422 = vmatpush1.msra.mxu0 0.0
        %423 = vmatprep.subr.mxu0 0.0
        %424 = vmatpush1.msra.mxu0 0.0
        %425 = vmatprep.subr.mxu0 0.0
        %426 = vmatpush1.msra.mxu0 0.0
        %427 = vmatprep.subr.mxu0 0.0
        %428 = vmatpush1.msra.mxu0 0.0
        %429 = vmatprep.subr.mxu0 0.0
        %430 = vmatpush1.msra.mxu0 0.0
        %431 = vmatprep.subr.mxu0 0.0
        %432 = vmatpush1.msra.mxu0 0.0
        %433 = vmatprep.subr.mxu0 0.0
        %434 = vmatpush1.msra.mxu0 0.0
        %435 = vmatprep.subr.mxu0 0.0
        %436 = vmatpush1.msra.mxu0 0.0
        %437 = vmatprep.subr.mxu0 0.0
        %438 = vmatpush1.msra.mxu0 0.0
        %439 = vmatprep.subr.mxu0 0.0
        %440 = vmatpush1.msra.mxu0 0.0
        %441 = vmatprep.subr.mxu0 0.0
        %442 = vmatpush1.msra.mxu0 0.0
        %443 = vmatprep.subr.mxu0 0.0
        %444 = vmatpush1.msra.mxu0 0.0
        %445 = vmatprep.subr.mxu0 0.0
        %446 = vmatpush1.msra.mxu0 0.0
        %447 = vmatprep.subr.mxu0 0.0
        %448 = vmatpush1.msra.mxu0 0.0
        %449 = vmatprep.subr.mxu0 0.0
        %450 = vmatpush1.msra.mxu0 0.0
        %451 = vmatprep.subr.mxu0 0.0
        %452 = vmatpush1.msra.mxu0 0.0
        %453 = vmatprep.subr.mxu0 0.0
        %454 = vmatpush1.msra.mxu0 0.0
        %455 = vmatprep.subr.mxu0 0.0
        %456 = vmatpush1.msra.mxu0 0.0
        %457 = vmatprep.subr.mxu0 0.0
        %458 = vmatpush1.msra.mxu0 0.0
        %459 = vmatprep.subr.mxu0 0.0
        %460 = vmatpush1.msra.mxu0 0.0
        %461 = vmatprep.subr.mxu0 0.0
        %462 = vmatpush1.msra.mxu0 0.0
        %463 = vmatprep.subr.mxu0 0.0
        %464 = vmatpush1.msra.mxu0 0.0
        %465 = vmatprep.subr.mxu0 0.0
        %466 = vmatpush1.msra.mxu0 0.0
        %467 = vmatprep.mubr.f32.mxu0 0.0
        %v468 = vand.u32 %v283, 4294901760
        %469 = vmatmul.mubr.f32.gmra.mrb[0].mxu0 %v468
        %v470 = vpop.f32.mrb[0].mxu0
        %v471 = vadd.f32 %v365, %v470
        %v472 = vpop.f32.mrb[0].mxu0
        %473 = vmatprep.mubr.f32.mxu0 0.0
        %v474 = vand.u32 %v286, 4294901760
        %475 = vmatmul.mubr.f32.gmra.mrb[0].mxu0 %v474
        %v476 = vpop.f32.mrb[0].mxu0
        %v477 = vadd.f32 %v375, %v476
        %v478 = vpop.f32.mrb[0].mxu0
        %479 = vdwg.mxu0
        %480 = vmatprep.subr.mxu0 0.0
        %v481 = vand.u32 %v276, 4294901760
        %v482 = vsub.f32 %v276, %v481
        %483 = vmatpush1.msra.mxu0 %v482
        %484 = vmatprep.subr.mxu0 0.0
        %v485 = vand.u32 %v277, 4294901760
        %v486 = vsub.f32 %v277, %v485
        %487 = vmatpush1.msra.mxu0 %v486
        %488 = vmatprep.subr.mxu0 0.0
        %v489 = vand.u32 %v278, 4294901760
        %v490 = vsub.f32 %v278, %v489
        %491 = vmatpush1.msra.mxu0 %v490
        %492 = vmatprep.subr.mxu0 0.0
        %v493 = vand.u32 %v279, 4294901760
        %v494 = vsub.f32 %v279, %v493
        %495 = vmatpush1.msra.mxu0 %v494
        %496 = vmatprep.subr.mxu0 0.0
        %v497 = vand.u32 %v280, 4294901760
        %v498 = vsub.f32 %v280, %v497
        %499 = vmatpush1.msra.mxu0 %v498
        %500 = vmatprep.subr.mxu0 0.0
        %501 = vmatpush1.msra.mxu0 0.0
        %502 = vmatprep.subr.mxu0 0.0
        %503 = vmatpush1.msra.mxu0 0.0
        %504 = vmatprep.subr.mxu0 0.0
        %505 = vmatpush1.msra.mxu0 0.0
        %506 = vmatprep.subr.mxu0 0.0
        %507 = vmatpush1.msra.mxu0 0.0
        %508 = vmatprep.subr.mxu0 0.0
        %509 = vmatpush1.msra.mxu0 0.0
        %510 = vmatprep.subr.mxu0 0.0
        %511 = vmatpush1.msra.mxu0 0.0
        %512 = vmatprep.subr.mxu0 0.0
        %513 = vmatpush1.msra.mxu0 0.0
        %514 = vmatprep.subr.mxu0 0.0
        %515 = vmatpush1.msra.mxu0 0.0
        %516 = vmatprep.subr.mxu0 0.0
        %517 = vmatpush1.msra.mxu0 0.0
        %518 = vmatprep.subr.mxu0 0.0
        %519 = vmatpush1.msra.mxu0 0.0
        %520 = vmatprep.subr.mxu0 0.0
        %521 = vmatpush1.msra.mxu0 0.0
        %522 = vmatprep.subr.mxu0 0.0
        %523 = vmatpush1.msra.mxu0 0.0
        %524 = vmatprep.subr.mxu0 0.0
        %525 = vmatpush1.msra.mxu0 0.0
        %526 = vmatprep.subr.mxu0 0.0
        %527 = vmatpush1.msra.mxu0 0.0
        %528 = vmatprep.subr.mxu0 0.0
        %529 = vmatpush1.msra.mxu0 0.0
        %530 = vmatprep.subr.mxu0 0.0
        %531 = vmatpush1.msra.mxu0 0.0
        %532 = vmatprep.subr.mxu0 0.0
        %533 = vmatpush1.msra.mxu0 0.0
        %534 = vmatprep.subr.mxu0 0.0
        %535 = vmatpush1.msra.mxu0 0.0
        %536 = vmatprep.subr.mxu0 0.0
        %537 = vmatpush1.msra.mxu0 0.0
        %538 = vmatprep.subr.mxu0 0.0
        %539 = vmatpush1.msra.mxu0 0.0
        %540 = vmatprep.subr.mxu0 0.0
        %541 = vmatpush1.msra.mxu0 0.0
        %542 = vmatprep.subr.mxu0 0.0
        %543 = vmatpush1.msra.mxu0 0.0
        %544 = vmatprep.subr.mxu0 0.0
        %545 = vmatpush1.msra.mxu0 0.0
        %546 = vmatprep.subr.mxu0 0.0
        %547 = vmatpush1.msra.mxu0 0.0
        %548 = vmatprep.subr.mxu0 0.0
        %549 = vmatpush1.msra.mxu0 0.0
        %550 = vmatprep.subr.mxu0 0.0
        %551 = vmatpush1.msra.mxu0 0.0
        %552 = vmatprep.subr.mxu0 0.0
        %553 = vmatpush1.msra.mxu0 0.0
        %554 = vmatprep.mubr.f32.mxu0 0.0
        %v555 = vand.u32 %v283, 4294901760
        %v556 = vsub.f32 %v283, %v555
        %557 = vmatmul.mubr.f32.gmra.mrb[0].mxu0 %v556
        %v558 = vpop.f32.mrb[0].mxu0
        %v559 = vadd.f32 %v471, %v558
        %v560 = vpop.f32.mrb[0].mxu0
        %561 = vmatprep.mubr.f32.mxu0 0.0
        %v562 = vand.u32 %v286, 4294901760
        %v563 = vsub.f32 %v286, %v562
        %564 = vmatmul.mubr.f32.gmra.mrb[0].mxu0 %v563
        %v565 = vpop.f32.mrb[0].mxu0
        %v566 = vadd.f32 %v477, %v565
        %v567 = vpop.f32.mrb[0].mxu0
        %568 = vdwg.mxu0
        %569 = vmatprep.subr.mxu0 0.0
        %v570 = vand.u32 %v276, 4294901760
        %571 = vmatpush1.msra.mxu0 %v570
        %572 = vmatprep.subr.mxu0 0.0
        %v573 = vand.u32 %v277, 4294901760
        %574 = vmatpush1.msra.mxu0 %v573
        %575 = vmatprep.subr.mxu0 0.0
        %v576 = vand.u32 %v278, 4294901760
        %577 = vmatpush1.msra.mxu0 %v576
        %578 = vmatprep.subr.mxu0 0.0
        %v579 = vand.u32 %v279, 4294901760
        %580 = vmatpush1.msra.mxu0 %v579
        %581 = vmatprep.subr.mxu0 0.0
        %v582 = vand.u32 %v280, 4294901760
        %583 = vmatpush1.msra.mxu0 %v582
        %584 = vmatprep.subr.mxu0 0.0
        %585 = vmatpush1.msra.mxu0 0.0
        %586 = vmatprep.subr.mxu0 0.0
        %587 = vmatpush1.msra.mxu0 0.0
        %588 = vmatprep.subr.mxu0 0.0
        %589 = vmatpush1.msra.mxu0 0.0
        %590 = vmatprep.subr.mxu0 0.0
        %591 = vmatpush1.msra.mxu0 0.0
        %592 = vmatprep.subr.mxu0 0.0
        %593 = vmatpush1.msra.mxu0 0.0
        %594 = vmatprep.subr.mxu0 0.0
        %595 = vmatpush1.msra.mxu0 0.0
        %596 = vmatprep.subr.mxu0 0.0
        %597 = vmatpush1.msra.mxu0 0.0
        %598 = vmatprep.subr.mxu0 0.0
        %599 = vmatpush1.msra.mxu0 0.0
        %600 = vmatprep.subr.mxu0 0.0
        %601 = vmatpush1.msra.mxu0 0.0
        %602 = vmatprep.subr.mxu0 0.0
        %603 = vmatpush1.msra.mxu0 0.0
        %604 = vmatprep.subr.mxu0 0.0
        %605 = vmatpush1.msra.mxu0 0.0
        %606 = vmatprep.subr.mxu0 0.0
        %607 = vmatpush1.msra.mxu0 0.0
        %608 = vmatprep.subr.mxu0 0.0
        %609 = vmatpush1.msra.mxu0 0.0
        %610 = vmatprep.subr.mxu0 0.0
        %611 = vmatpush1.msra.mxu0 0.0
        %612 = vmatprep.subr.mxu0 0.0
        %613 = vmatpush1.msra.mxu0 0.0
        %614 = vmatprep.subr.mxu0 0.0
        %615 = vmatpush1.msra.mxu0 0.0
        %616 = vmatprep.subr.mxu0 0.0
        %617 = vmatpush1.msra.mxu0 0.0
        %618 = vmatprep.subr.mxu0 0.0
        %619 = vmatpush1.msra.mxu0 0.0
        %620 = vmatprep.subr.mxu0 0.0
        %621 = vmatpush1.msra.mxu0 0.0
        %622 = vmatprep.subr.mxu0 0.0
        %623 = vmatpush1.msra.mxu0 0.0
        %624 = vmatprep.subr.mxu0 0.0
        %625 = vmatpush1.msra.mxu0 0.0
        %626 = vmatprep.subr.mxu0 0.0
        %627 = vmatpush1.msra.mxu0 0.0
        %628 = vmatprep.subr.mxu0 0.0
        %629 = vmatpush1.msra.mxu0 0.0
        %630 = vmatprep.subr.mxu0 0.0
        %631 = vmatpush1.msra.mxu0 0.0
        %632 = vmatprep.subr.mxu0 0.0
        %633 = vmatpush1.msra.mxu0 0.0
        %634 = vmatprep.subr.mxu0 0.0
        %635 = vmatpush1.msra.mxu0 0.0
        %636 = vmatprep.subr.mxu0 0.0
        %637 = vmatpush1.msra.mxu0 0.0
        %638 = vmatprep.mubr.f32.mxu0 0.0
        %v639 = vand.u32 %v283, 4294901760
        %v640 = vsub.f32 %v283, %v639
        %v641 = vand.u32 %v640, 4294901760
        %642 = vmatmul.mubr.f32.gmra.mrb[0].mxu0 %v641
        %v643 = vpop.f32.mrb[0].mxu0
        %v644 = vadd.f32 %v559, %v643
        %v645 = vpop.f32.mrb[0].mxu0
        %646 = vmatprep.mubr.f32.mxu0 0.0
        %v647 = vand.u32 %v286, 4294901760
        %v648 = vsub.f32 %v286, %v647
        %v649 = vand.u32 %v648, 4294901760
        %650 = vmatmul.mubr.f32.gmra.mrb[0].mxu0 %v649
        %v651 = vpop.f32.mrb[0].mxu0
        %v652 = vadd.f32 %v566, %v651
        %v653 = vpop.f32.mrb[0].mxu0
        %654 = vdwg.mxu0
        %655 = vmatprep.subr.mxu0 0.0
        %v656 = vand.u32 %v276, 4294901760
        %v657 = vsub.f32 %v276, %v656
        %v658 = vand.u32 %v657, 4294901760
        %659 = vmatpush1.msra.mxu0 %v658
        %660 = vmatprep.subr.mxu0 0.0
        %v661 = vand.u32 %v277, 4294901760
        %v662 = vsub.f32 %v277, %v661
        %v663 = vand.u32 %v662, 4294901760
        %664 = vmatpush1.msra.mxu0 %v663
        %665 = vmatprep.subr.mxu0 0.0
        %v666 = vand.u32 %v278, 4294901760
        %v667 = vsub.f32 %v278, %v666
        %v668 = vand.u32 %v667, 4294901760
        %669 = vmatpush1.msra.mxu0 %v668
        %670 = vmatprep.subr.mxu0 0.0
        %v671 = vand.u32 %v279, 4294901760
        %v672 = vsub.f32 %v279, %v671
        %v673 = vand.u32 %v672, 4294901760
        %674 = vmatpush1.msra.mxu0 %v673
        %675 = vmatprep.subr.mxu0 0.0
        %v676 = vand.u32 %v280, 4294901760
        %v677 = vsub.f32 %v280, %v676
        %v678 = vand.u32 %v677, 4294901760
        %679 = vmatpush1.msra.mxu0 %v678
        %680 = vmatprep.subr.mxu0 0.0
        %681 = vmatpush1.msra.mxu0 0.0
        %682 = vmatprep.subr.mxu0 0.0
        %683 = vmatpush1.msra.mxu0 0.0
        %684 = vmatprep.subr.mxu0 0.0
        %685 = vmatpush1.msra.mxu0 0.0
        %686 = vmatprep.subr.mxu0 0.0
        %687 = vmatpush1.msra.mxu0 0.0
        %688 = vmatprep.subr.mxu0 0.0
        %689 = vmatpush1.msra.mxu0 0.0
        %690 = vmatprep.subr.mxu0 0.0
        %691 = vmatpush1.msra.mxu0 0.0
        %692 = vmatprep.subr.mxu0 0.0
        %693 = vmatpush1.msra.mxu0 0.0
        %694 = vmatprep.subr.mxu0 0.0
        %695 = vmatpush1.msra.mxu0 0.0
        %696 = vmatprep.subr.mxu0 0.0
        %697 = vmatpush1.msra.mxu0 0.0
        %698 = vmatprep.subr.mxu0 0.0
        %699 = vmatpush1.msra.mxu0 0.0
        %700 = vmatprep.subr.mxu0 0.0
        %701 = vmatpush1.msra.mxu0 0.0
        %702 = vmatprep.subr.mxu0 0.0
        %703 = vmatpush1.msra.mxu0 0.0
        %704 = vmatprep.subr.mxu0 0.0
        %705 = vmatpush1.msra.mxu0 0.0
        %706 = vmatprep.subr.mxu0 0.0
        %707 = vmatpush1.msra.mxu0 0.0
        %708 = vmatprep.subr.mxu0 0.0
        %709 = vmatpush1.msra.mxu0 0.0
        %710 = vmatprep.subr.mxu0 0.0
        %711 = vmatpush1.msra.mxu0 0.0
        %712 = vmatprep.subr.mxu0 0.0
        %713 = vmatpush1.msra.mxu0 0.0
        %714 = vmatprep.subr.mxu0 0.0
        %715 = vmatpush1.msra.mxu0 0.0
        %716 = vmatprep.subr.mxu0 0.0
        %717 = vmatpush1.msra.mxu0 0.0
        %718 = vmatprep.subr.mxu0 0.0
        %719 = vmatpush1.msra.mxu0 0.0
        %720 = vmatprep.subr.mxu0 0.0
        %721 = vmatpush1.msra.mxu0 0.0
        %722 = vmatprep.subr.mxu0 0.0
        %723 = vmatpush1.msra.mxu0 0.0
        %724 = vmatprep.subr.mxu0 0.0
        %725 = vmatpush1.msra.mxu0 0.0
        %726 = vmatprep.subr.mxu0 0.0
        %727 = vmatpush1.msra.mxu0 0.0
        %728 = vmatprep.subr.mxu0 0.0
        %729 = vmatpush1.msra.mxu0 0.0
        %730 = vmatprep.subr.mxu0 0.0
        %731 = vmatpush1.msra.mxu0 0.0
        %732 = vmatprep.subr.mxu0 0.0
        %733 = vmatpush1.msra.mxu0 0.0
        %734 = vmatprep.mubr.f32.mxu0 0.0
        %v735 = vand.u32 %v283, 4294901760
        %736 = vmatmul.mubr.f32.gmra.mrb[0].mxu0 %v735
        %v737 = vpop.f32.mrb[0].mxu0
        %v738 = vadd.f32 %v644, %v737
        %v739 = vpop.f32.mrb[0].mxu0
        %740 = vmatprep.mubr.f32.mxu0 0.0
        %v741 = vand.u32 %v286, 4294901760
        %742 = vmatmul.mubr.f32.gmra.mrb[0].mxu0 %v741
        %v743 = vpop.f32.mrb[0].mxu0
        %v744 = vadd.f32 %v652, %v743
        %v745 = vpop.f32.mrb[0].mxu0
        %746 = vdwg.mxu0
        %747 = vmatprep.subr.mxu0 0.0
        %v748 = vand.u32 %v276, 4294901760
        %749 = vmatpush1.msra.mxu0 %v748
        %750 = vmatprep.subr.mxu0 0.0
        %v751 = vand.u32 %v277, 4294901760
        %752 = vmatpush1.msra.mxu0 %v751
        %753 = vmatprep.subr.mxu0 0.0
        %v754 = vand.u32 %v278, 4294901760
        %755 = vmatpush1.msra.mxu0 %v754
        %756 = vmatprep.subr.mxu0 0.0
        %v757 = vand.u32 %v279, 4294901760
        %758 = vmatpush1.msra.mxu0 %v757
        %759 = vmatprep.subr.mxu0 0.0
        %v760 = vand.u32 %v280, 4294901760
        %761 = vmatpush1.msra.mxu0 %v760
        %762 = vmatprep.subr.mxu0 0.0
        %763 = vmatpush1.msra.mxu0 0.0
        %764 = vmatprep.subr.mxu0 0.0
        %765 = vmatpush1.msra.mxu0 0.0
        %766 = vmatprep.subr.mxu0 0.0
        %767 = vmatpush1.msra.mxu0 0.0
        %768 = vmatprep.subr.mxu0 0.0
        %769 = vmatpush1.msra.mxu0 0.0
        %770 = vmatprep.subr.mxu0 0.0
        %771 = vmatpush1.msra.mxu0 0.0
        %772 = vmatprep.subr.mxu0 0.0
        %773 = vmatpush1.msra.mxu0 0.0
        %774 = vmatprep.subr.mxu0 0.0
        %775 = vmatpush1.msra.mxu0 0.0
        %776 = vmatprep.subr.mxu0 0.0
        %777 = vmatpush1.msra.mxu0 0.0
        %778 = vmatprep.subr.mxu0 0.0
        %779 = vmatpush1.msra.mxu0 0.0
        %780 = vmatprep.subr.mxu0 0.0
        %781 = vmatpush1.msra.mxu0 0.0
        %782 = vmatprep.subr.mxu0 0.0
        %783 = vmatpush1.msra.mxu0 0.0
        %784 = vmatprep.subr.mxu0 0.0
        %785 = vmatpush1.msra.mxu0 0.0
        %786 = vmatprep.subr.mxu0 0.0
        %787 = vmatpush1.msra.mxu0 0.0
        %788 = vmatprep.subr.mxu0 0.0
        %789 = vmatpush1.msra.mxu0 0.0
        %790 = vmatprep.subr.mxu0 0.0
        %791 = vmatpush1.msra.mxu0 0.0
        %792 = vmatprep.subr.mxu0 0.0
        %793 = vmatpush1.msra.mxu0 0.0
        %794 = vmatprep.subr.mxu0 0.0
        %795 = vmatpush1.msra.mxu0 0.0
        %796 = vmatprep.subr.mxu0 0.0
        %797 = vmatpush1.msra.mxu0 0.0
        %798 = vmatprep.subr.mxu0 0.0
        %799 = vmatpush1.msra.mxu0 0.0
        %800 = vmatprep.subr.mxu0 0.0
        %801 = vmatpush1.msra.mxu0 0.0
        %802 = vmatprep.subr.mxu0 0.0
        %803 = vmatpush1.msra.mxu0 0.0
        %804 = vmatprep.subr.mxu0 0.0
        %805 = vmatpush1.msra.mxu0 0.0
        %806 = vmatprep.subr.mxu0 0.0
        %807 = vmatpush1.msra.mxu0 0.0
        %808 = vmatprep.subr.mxu0 0.0
        %809 = vmatpush1.msra.mxu0 0.0
        %810 = vmatprep.subr.mxu0 0.0
        %811 = vmatpush1.msra.mxu0 0.0
        %812 = vmatprep.subr.mxu0 0.0
        %813 = vmatpush1.msra.mxu0 0.0
        %814 = vmatprep.subr.mxu0 0.0
        %815 = vmatpush1.msra.mxu0 0.0
        %816 = vmatprep.mubr.f32.mxu0 0.0
        %v817 = vand.u32 %v283, 4294901760
        %818 = vmatmul.mubr.f32.gmra.mrb[0].mxu0 %v817
        %v819 = vpop.f32.mrb[0].mxu0
        %v820 = vadd.f32 %v738, %v819
        %v821 = vpop.f32.mrb[0].mxu0
        %822 = vmatprep.mubr.f32.mxu0 0.0
        %v823 = vand.u32 %v286, 4294901760
        %824 = vmatmul.mubr.f32.gmra.mrb[0].mxu0 %v823
        %v825 = vpop.f32.mrb[0].mxu0
        %v826 = vadd.f32 %v744, %v825
        %v827 = vpop.f32.mrb[0].mxu0
        %828 = vdwg.mxu0
        %829 = vadd.xlane.f32.xlu0 %v820
        %v830 = vpop.xlane.xlu0 %829
        %831 = vadd.xlane.f32.xlu0 %v826
        %v832 = vpop.xlane.xlu0 %831
        %v833 = vrcp.pop 128.0
        %v834 = vmul.f32 %v830, %v833
        %v835 = vmul.f32 %v832, %v833
        %v836 = vsub.f32 %v820, %v834
        %v837 = vsub.f32 %v826, %v835
        %v838 = vmul.f32 %v836, %v836
        %v839 = vmul.f32 %v837, %v837
        %840 = vadd.xlane.f32.xlu0 %v838
        %v841 = vpop.xlane.xlu0 %840
        %842 = vadd.xlane.f32.xlu0 %v839
        %v843 = vpop.xlane.xlu0 %842
        %v844 = vmul.f32 %v841, %v833
        %v845 = vmul.f32 %v843, %v833
        %v846 = vadd.f32 %v844, 1e-05
        %v847 = vadd.f32 %v845, 1e-05
        %v848 = vrsqrt.pop %v846
        %v849 = vrsqrt.pop %v847
        %v850 = vmul.f32 %v836, %v848
        %v851 = vmul.f32 %v837, %v849
        %v852 = vld [vmem:[%s3] sm:$0x1]
        %v854 = vlaneseq
        %v855 = vshrl.u32 %v854, 7
        %v856 = vsub.s32 0, %v855
        %v857 = vrot.slane %v852, %v856
        %v859 = vmul.f32 %v850, %v857
        %v860 = vmul.f32 %v851, %v857
        %v861 = vld [vmem:[%s4] sm:$0x1]
        %v863 = vlaneseq
        %v864 = vshrl.u32 %v863, 7
        %v865 = vsub.s32 0, %v864
        %v866 = vrot.slane %v861, %v865
        %v868 = vadd.f32 %v859, %v866
        %v869 = vadd.f32 %v860, %v866
        %870 = vst [vmem:[%s234] sm:$0xff] %v868
        %871 = vst [vmem:[%s234 + $0x8] sm:$0xff] %v869
        %s872 = sand.u32 %s142, 1
        %s873 = scalar_lea.sflag [#allocation3], %s872
        %s874 = sand.u32 %s142, 1
        %s875 = smul.addr %s874, 16
        %s876 = scalar_lea.vmem [#allocation2], %s875
        // Predicated region
        $region41: #{tpu_custom_call.1} parent=39 // pred_check
          %p877 = pneg %p152
        $region42: #{tpu_custom_call.1} parent=39 // pred_check_branch
          %879 = sbr.rel (%p877) target = $region44
        $region43: #{tpu_custom_call.1} parent=39 // pred_region
          %s880 = smul.u32 2, %s19
          %s882 = ssub.s32 256, 256
          %883 = vsyncadd %s873, %s882
          %s884 = smul.addr %s880, 128
          %s885 = scalar_lea.hbm %s5, %s884
          %s886 = sshll.u32 %s876, 4
          %s887 = int_to_ptr.vmem [resolvable:$true] %s886
          %892 = dma.vmem_to_hbm [thread:$0]  %s887, 256, %s885, %s873, 128, 128, 8
        $region44: #{tpu_custom_call.1} parent=39 // pred_fallthru
          _
      $region40: #{tpu_custom_call.1} parent=5 // pred_fallthru
        _
      %p893 = scmp.le.s32.totalorder 2, %s14
      // Predicated region
      $region45: #{tpu_custom_call.1} parent=5 // pred_check
        %p894 = pneg %p893
      $region46: #{tpu_custom_call.1} parent=5 // pred_check_branch
        %896 = sbr.rel (%p894) target = $region48
      $region47: #{tpu_custom_call.1} parent=5 // pred_region
        %s897 = ssub.s32 %s14, 2
        // Predicated region
        $region49: #{tpu_custom_call.1} parent=47 // pred_check
          %p898 = pneg %p158
        $region50: #{tpu_custom_call.1} parent=47 // pred_check_branch
          %900 = sbr.rel (%p898) target = $region52
        $region51: #{tpu_custom_call.1} parent=47 // pred_region
          %s901 = sand.u32 %s143, 1
          %s902 = scalar_lea.sflag [#allocation3], %s901
          %s903 = sand.u32 %s143, 1
          %s904 = smul.addr %s903, 16
          %s905 = scalar_lea.vmem [#allocation2], %s904
          %906 = dma.done %s902, 256
        $region52: #{tpu_custom_call.1} parent=47 // pred_fallthru
          _
      $region48: #{tpu_custom_call.1} parent=5 // pred_fallthru
        _
    $region6: #{tpu_custom_call.1} parent=1 // loop_footer
      %s18 = sadd.s32 1, %s14
    $region7: #{tpu_custom_call.1} parent=1 // loop_footer_branch
      %13 = sbr.rel target = $region3
    $region8: #{tpu_custom_call.1} parent=1 // loop_exit
      _
    %907 = vsyncpa [#allocation3], 1
    %s908 = scalar_lea.sflag [#allocation3], 1
    %909 = vsyncpa %s908, 1

</llo_original>
